<compile_context>
chip_gen: v6e
topology: v6e:2x2x1
jax: 0.10.0
libtpu: 0.0.40
codegen_flags: <defaults>
</compile_context>

<pallas_src>
import functools
import math

import jax
import jax.numpy as jnp
from jax.experimental import pallas as pl
from jax.experimental.pallas import tpu as pltpu


def maxout_kernel(x_ref, w_ref, b_ref, o_ref, *, hidden, pool):
    # x_ref: (tm, d_in), w_ref: (d_in, hidden*pool) [pool-major columns],
    # b_ref: (1, hidden*pool), o_ref: (tm, hidden)
    h = jnp.dot(x_ref[...], w_ref[...], preferred_element_type=jnp.float32)
    h = h + b_ref[...].astype(jnp.float32)
    # max over pool pieces: pool-major layout => contiguous (tm, hidden) slabs
    m = h[:, 0:hidden]
    for p in range(1, pool):
        m = jnp.maximum(m, h[:, p * hidden:(p + 1) * hidden])
    o_ref[...] = m.astype(o_ref.dtype)


def _round_up(v, mult):
    return ((v + mult - 1) // mult) * mult


def maxout(x, weight, bias, hidden_size, pool_size, *, tm=256):
    """Maxout forward.

    x:      [..., input_size]
    weight: [hidden_size * pool_size, input_size]   (PyTorch nn.Linear layout)
    bias:   [hidden_size * pool_size]
    returns [..., hidden_size]
    """
    orig_shape = x.shape
    d_in = orig_shape[-1]
    hp = hidden_size * pool_size

    # Host-side, one-time column permutation: new column c = p*hidden + j
    # holds the old column j*pool + p (PyTorch's view(..., hidden, pool) order).
    cols = jnp.arange(hp)
    perm = (cols % hidden_size) * pool_size + (cols // hidden_size)
    w_perm = weight.T[:, perm]                 # (d_in, hidden*pool), pool-major
    b_perm = bias[perm].reshape(1, hp)

    x2 = x.reshape(-1, d_in)
    m = x2.shape[0]

    # Row tile: large for MXU occupancy, shrunk (multiple of 8) for tiny inputs.
    tm_eff = min(tm, _round_up(m, 8))
    tm_eff = _round_up(tm_eff, 8)
    m_pad = pl.cdiv(m, tm_eff) * tm_eff
    if m_pad != m:
        x2 = jnp.pad(x2, ((0, m_pad - m), (0, 0)))

    itemsize = jnp.dtype(x.dtype).itemsize
    cost = pl.CostEstimate(
        flops=int(2 * m_pad * d_in * hp),
        transcendentals=0,
        bytes_accessed=int(m_pad * d_in * itemsize
                           + w_perm.size * jnp.dtype(w_perm.dtype).itemsize
                           + b_perm.size * jnp.dtype(b_perm.dtype).itemsize
                           + m_pad * hidden_size * itemsize),
    )

    out = pl.pallas_call(
        functools.partial(maxout_kernel, hidden=hidden_size, pool=pool_size),
        out_shape=jax.ShapeDtypeStruct((m_pad, hidden_size), x.dtype),
        grid_spec=pltpu.PrefetchScalarGridSpec(
            num_scalar_prefetch=0,
            grid=(m_pad // tm_eff,),
            in_specs=[
                pl.BlockSpec((tm_eff, d_in), lambda i: (i, 0)),
                pl.BlockSpec((d_in, hp), lambda i: (0, 0)),
                pl.BlockSpec((1, hp), lambda i: (0, 0)),
            ],
            out_specs=pl.BlockSpec((tm_eff, hidden_size), lambda i: (i, 0)),
        ),
        compiler_params=pltpu.CompilerParams(
            dimension_semantics=("parallel",),
            vmem_limit_bytes=64 * 1024 * 1024,
        ),
        cost_estimate=cost,
    )(x2, w_perm, b_perm)

    if m_pad != m:
        out = out[:m]
    return out.reshape(*orig_shape[:-1], hidden_size)


if __name__ == "__main__":
    # Small but 128-lane-aligned shapes (lane-dense output, full MXU columns).
    batch, seq = 2, 8
    input_size, hidden_size, pool_size = 128, 128, 2

    key = jax.random.PRNGKey(0)
    k_w, k_b, k_x = jax.random.split(key, 3)

    # Deterministic init in the spirit of nn.Linear defaults (uniform +-1/sqrt(fan_in)).
    limit = 1.0 / math.sqrt(input_size)
    weight = jax.random.uniform(k_w, (hidden_size * pool_size, input_size),
                                jnp.float32, minval=-limit, maxval=limit)
    bias = jax.random.uniform(k_b, (hidden_size * pool_size,),
                              jnp.float32, minval=-limit, maxval=limit)
    x = jax.random.normal(k_x, (batch, seq, input_size), jnp.float32)

    y = maxout(x, weight, bias, hidden_size, pool_size, tm=256)
    y = jax.block_until_ready(y)

    # Pure-JAX reference (matches the PyTorch module exactly).
    lin = x @ weight.T + bias                                   # (..., H*P)
    y_ref = jnp.max(lin.reshape(batch, seq, hidden_size, pool_size), axis=-1)

    assert y.shape == (batch, seq, hidden_size)
    assert jnp.allclose(y, y_ref, atol=1e-5, rtol=1e-5)

    print("KERNEL_OK")
</pallas_src>

<mosaic_0001>
module attributes {stable_mosaic.version = 11 : i64} {
  func.func @maxout_kernel(%arg0: i32, %arg1: memref<16x128xf32, #tpu.memory_space<vmem>>, %arg2: memref<128x256xf32, #tpu.memory_space<vmem>>, %arg3: memref<1x256xf32, #tpu.memory_space<vmem>>, %arg4: memref<16x128xf32, #tpu.memory_space<vmem>>) attributes {dimension_semantics = [#tpu.dimension_semantics<parallel>], iteration_bounds = array<i64: 1>, scalar_prefetch = 0 : i64, scratch_operands = 0 : i64, tpu.core_type = #tpu.core_type<tc>, window_params = [{transform_indices = @transform_0, window_bounds = array<i64: 16, 128>}, {pipeline_mode = #tpu.pipeline_mode<synchronous>, transform_indices = @transform_1, window_bounds = array<i64: 128, 256>}, {pipeline_mode = #tpu.pipeline_mode<synchronous>, transform_indices = @transform_2, window_bounds = array<i64: 1, 256>}, {transform_indices = @transform_3, window_bounds = array<i64: 16, 128>}]} {
    %c0 = arith.constant 0 : index
    %c0_0 = arith.constant 0 : index
    %0 = vector.load %arg1[%c0, %c0_0] : memref<16x128xf32, #tpu.memory_space<vmem>>, vector<16x128xf32>
    %c0_1 = arith.constant 0 : index
    %c0_2 = arith.constant 0 : index
    %1 = vector.load %arg2[%c0_1, %c0_2] : memref<128x256xf32, #tpu.memory_space<vmem>>, vector<128x256xf32>
    %cst = arith.constant dense<0.000000e+00> : vector<16x256xf32>
    %2 = tpu.matmul %0, %1, %cst {dimension_numbers = #tpu.dot_dimension_numbers<[1], [0], [0], [1], [0, 0, 1, 1], [], []>} : vector<16x128xf32>, vector<128x256xf32>, vector<16x256xf32> -> vector<16x256xf32>
    %c0_3 = arith.constant 0 : index
    %c0_4 = arith.constant 0 : index
    %3 = vector.load %arg3[%c0_3, %c0_4] : memref<1x256xf32, #tpu.memory_space<vmem>>, vector<1x256xf32>
    %4 = vector.broadcast %3 : vector<1x256xf32> to vector<16x256xf32>
    %5 = arith.addf %2, %4 : vector<16x256xf32>
    %6 = vector.extract_strided_slice %5 {offsets = [0, 0], sizes = [16, 128], strides = [1, 1]} : vector<16x256xf32> to vector<16x128xf32>
    %7 = vector.extract_strided_slice %5 {offsets = [0, 128], sizes = [16, 128], strides = [1, 1]} : vector<16x256xf32> to vector<16x128xf32>
    %8 = arith.maximumf %6, %7 : vector<16x128xf32>
    %c0_5 = arith.constant 0 : index
    %c0_6 = arith.constant 0 : index
    %9 = vector.load %arg4[%c0_5, %c0_6] : memref<16x128xf32, #tpu.memory_space<vmem>>, vector<16x128xf32>
    tpu.vector_store %arg4[%c0_5, %c0_6], %8 {strides = array<i32>} : memref<16x128xf32, #tpu.memory_space<vmem>>, vector<16x128xf32>,
    return
  }
  func.func @transform_0(%arg0: i32) -> (i32, i32) {
    %c0_i32 = arith.constant 0 : i32
    %c0_i32_0 = arith.constant 0 : i32
    return %arg0, %c0_i32 : i32, i32
  }
  func.func @transform_1(%arg0: i32) -> (i32, i32) {
    %c0_i32 = arith.constant 0 : i32
    %c0_i32_0 = arith.constant 0 : i32
    %c0_i32_1 = arith.constant 0 : i32
    return %c0_i32, %c0_i32_0 : i32, i32
  }
  func.func @transform_2(%arg0: i32) -> (i32, i32) {
    %c0_i32 = arith.constant 0 : i32
    %c0_i32_0 = arith.constant 0 : i32
    %c0_i32_1 = arith.constant 0 : i32
    return %c0_i32, %c0_i32_0 : i32, i32
  }
  func.func @transform_3(%arg0: i32) -> (i32, i32) {
    %c0_i32 = arith.constant 0 : i32
    %c0_i32_0 = arith.constant 0 : i32
    return %arg0, %c0_i32 : i32, i32
  }
}

</mosaic_0001>

<llo_original>
// kernel: tpu_custom_call.1
$region0: #{tpu_custom_call.1}
  #allocation0 [shape = 'u32[]', space=smem, size = 0x4, offset = 0x4, fixed_abs, tag = 'smem constant byte address 0x4 - core index']
  #allocation1 [shape = 'u32[144,128]{1,0:T(1,128)}', space=vmem, size = 0x12000, scoped, tag = 'internal scratch']
  %s0 = inlined_call_operand.hbm [shape: f32[16,128], index: 0, kind: input, shape index: {}]
  %s1 = inlined_call_operand.hbm [shape: f32[128,256], index: 1, kind: input, shape index: {}]
  %s2 = inlined_call_operand.vmem [shape: f32[1,256], index: 2, kind: input, shape index: {}]
  %s3 = inlined_call_operand.hbm [shape: f32[16,128], index: 3, kind: output, shape index: {}]
  %s4 = sld [smem:[#allocation0]]
  $region30: #{tpu_custom_call.1} parent=0
    _
  %s6 = ssub.s32 1, %s4
  %s7 = scalar_select 0, %s6, %s4
  $region1: #{tpu_custom_call.1} parent=0
    #allocation2 [shape = 'u8[8192]{0}', space=vmem, size = 0x2000, scoped, tag = 'input window, operand 0, single buffered']
    #allocation3 [shape = 's32[1]{0}', space=sflag, size = 0x4, scoped, tag = 'scoped memory for tpu_custom_call.1']
    #allocation4 [shape = 's32[1]{0}', space=sflag, size = 0x4, scoped, tag = 'scoped memory for tpu_custom_call.1']
    #allocation5 [shape = 'u8[131072]{0}', space=vmem, size = 0x20000, scoped, tag = 'input window, operand 1, single buffered']
    #allocation6 [shape = 's32[1]{0}', space=sflag, size = 0x4, scoped, tag = 'scoped memory for tpu_custom_call.1']
    #allocation7 [shape = 'u8[8192]{0}', space=vmem, size = 0x2000, scoped, tag = 'output window, operand 0, single buffered']
    %8 = vsyncpa [#allocation3], 0
    %9 = vsyncpa [#allocation6], 0
    %10 = vsyncpa [#allocation4], 0
    // Predicated region
    $region2: #{tpu_custom_call.1} parent=1 // pred_check
      _
    $region3: #{tpu_custom_call.1} parent=1 // pred_check_branch
      %12 = sbr.rel (0) target = $region5
    $region4: #{tpu_custom_call.1} parent=1 // pred_region
      %s14 = ssub.s32 256, 256
      %15 = vsyncadd [#allocation3], %s14
      %s16 = sshll.u32 [#allocation2], 4
      %s17 = int_to_ptr.vmem [resolvable:$true] %s16
      %22 = dma.hbm_to_vmem [thread:$0]  %s0, 256, %s17, [#allocation3], 128, 128, 8
    $region5: #{tpu_custom_call.1} parent=1 // pred_fallthru
      _
    // Predicated region
    $region6: #{tpu_custom_call.1} parent=1 // pred_check
      _
    $region7: #{tpu_custom_call.1} parent=1 // pred_check_branch
      %24 = sbr.rel (0) target = $region9
    $region8: #{tpu_custom_call.1} parent=1 // pred_region
      %s26 = ssub.s32 4096, 4096
      %27 = vsyncadd [#allocation6], %s26
      %s28 = sshll.u32 [#allocation5], 4
      %s29 = int_to_ptr.vmem [resolvable:$true] %s28
      %34 = dma.hbm_to_vmem [thread:$0]  %s1, 4096, %s29, [#allocation6], 256, 256, 16
    $region9: #{tpu_custom_call.1} parent=1 // pred_fallthru
      _
    // Predicated region
    $region10: #{tpu_custom_call.1} parent=1 // pred_check
      _
    $region11: #{tpu_custom_call.1} parent=1 // pred_check_branch
      %36 = sbr.rel (0) target = $region13
    $region12: #{tpu_custom_call.1} parent=1 // pred_region
      _
    $region13: #{tpu_custom_call.1} parent=1 // pred_fallthru
      _
    // Predicated region
    $region14: #{tpu_custom_call.1} parent=1 // pred_check
      _
    $region15: #{tpu_custom_call.1} parent=1 // pred_check_branch
      %38 = sbr.rel (0) target = $region17
    $region16: #{tpu_custom_call.1} parent=1 // pred_region
      %39 = dma.done [#allocation3], 256
    $region17: #{tpu_custom_call.1} parent=1 // pred_fallthru
      _
    // Predicated region
    $region18: #{tpu_custom_call.1} parent=1 // pred_check
      _
    $region19: #{tpu_custom_call.1} parent=1 // pred_check_branch
      %41 = sbr.rel (0) target = $region21
    $region20: #{tpu_custom_call.1} parent=1 // pred_region
      %42 = dma.done [#allocation6], 4096
    $region21: #{tpu_custom_call.1} parent=1 // pred_fallthru
      _
    %v43 = vld [vmem:[#allocation2] sm:$0xff]
    %v44 = vld [vmem:[#allocation2 + $0x8] sm:$0xff]
    %v45 = vld [vmem:[#allocation5] sm:$0xff]
    %v46 = vld [vmem:[#allocation5 + $0x8] sm:$0xff]
    %v47 = vld [vmem:[#allocation5 + $0x10] sm:$0xff]
    %v48 = vld [vmem:[#allocation5 + $0x18] sm:$0xff]
    %v49 = vld [vmem:[#allocation5 + $0x20] sm:$0xff]
    %v50 = vld [vmem:[#allocation5 + $0x28] sm:$0xff]
    %v51 = vld [vmem:[#allocation5 + $0x30] sm:$0xff]
    %v52 = vld [vmem:[#allocation5 + $0x38] sm:$0xff]
    %v53 = vld [vmem:[#allocation5 + $0x40] sm:$0xff]
    %v54 = vld [vmem:[#allocation5 + $0x48] sm:$0xff]
    %v55 = vld [vmem:[#allocation5 + $0x50] sm:$0xff]
    %v56 = vld [vmem:[#allocation5 + $0x58] sm:$0xff]
    %v57 = vld [vmem:[#allocation5 + $0x60] sm:$0xff]
    %v58 = vld [vmem:[#allocation5 + $0x68] sm:$0xff]
    %v59 = vld [vmem:[#allocation5 + $0x70] sm:$0xff]
    %v60 = vld [vmem:[#allocation5 + $0x78] sm:$0xff]
    %v61 = vld [vmem:[#allocation5 + $0x80] sm:$0xff]
    %v62 = vld [vmem:[#allocation5 + $0x88] sm:$0xff]
    %v63 = vld [vmem:[#allocation5 + $0x90] sm:$0xff]
    %v64 = vld [vmem:[#allocation5 + $0x98] sm:$0xff]
    %v65 = vld [vmem:[#allocation5 + $0xa0] sm:$0xff]
    %v66 = vld [vmem:[#allocation5 + $0xa8] sm:$0xff]
    %v67 = vld [vmem:[#allocation5 + $0xb0] sm:$0xff]
    %v68 = vld [vmem:[#allocation5 + $0xb8] sm:$0xff]
    %v69 = vld [vmem:[#allocation5 + $0xc0] sm:$0xff]
    %v70 = vld [vmem:[#allocation5 + $0xc8] sm:$0xff]
    %v71 = vld [vmem:[#allocation5 + $0xd0] sm:$0xff]
    %v72 = vld [vmem:[#allocation5 + $0xd8] sm:$0xff]
    %v73 = vld [vmem:[#allocation5 + $0xe0] sm:$0xff]
    %v74 = vld [vmem:[#allocation5 + $0xe8] sm:$0xff]
    %v75 = vld [vmem:[#allocation5 + $0xf0] sm:$0xff]
    %v76 = vld [vmem:[#allocation5 + $0xf8] sm:$0xff]
    %v77 = vld [vmem:[%s2] sm:$0x3]
    %v79 = vlaneseq
    %v80 = vshrl.u32 %v79, 7
    %v81 = vsub.s32 0, %v80
    %v82 = vrot.slane %v77, %v81
    %v83 = vlaneseq
    %v84 = vshrl.u32 %v83, 7
    %v85 = vsub.s32 1, %v84
    %v86 = vrot.slane %v77, %v85
    %89 = vmatprep.subr.mxu0 %v76
    %90 = vmatpush1.msra.mxu0 %v75
    %91 = vmatprep.subr.mxu0 %v74
    %92 = vmatpush1.msra.mxu0 %v73
    %93 = vmatprep.subr.mxu0 %v72
    %94 = vmatpush1.msra.mxu0 %v71
    %95 = vmatprep.subr.mxu0 %v70
    %96 = vmatpush1.msra.mxu0 %v69
    %97 = vmatprep.subr.mxu0 %v68
    %98 = vmatpush1.msra.mxu0 %v67
    %99 = vmatprep.subr.mxu0 %v66
    %100 = vmatpush1.msra.mxu0 %v65
    %101 = vmatprep.subr.mxu0 %v64
    %102 = vmatpush1.msra.mxu0 %v63
    %103 = vmatprep.subr.mxu0 %v62
    %104 = vmatpush1.msra.mxu0 %v61
    %105 = vmatprep.subr.mxu0 %v60
    %106 = vmatpush1.msra.mxu0 %v59
    %107 = vmatprep.subr.mxu0 %v58
    %108 = vmatpush1.msra.mxu0 %v57
    %109 = vmatprep.subr.mxu0 %v56
    %110 = vmatpush1.msra.mxu0 %v55
    %111 = vmatprep.subr.mxu0 %v54
    %112 = vmatpush1.msra.mxu0 %v53
    %113 = vmatprep.subr.mxu0 %v52
    %114 = vmatpush1.msra.mxu0 %v51
    %115 = vmatprep.subr.mxu0 %v50
    %116 = vmatpush1.msra.mxu0 %v49
    %117 = vmatprep.subr.mxu0 %v48
    %118 = vmatpush1.msra.mxu0 %v47
    %119 = vmatprep.subr.mxu0 %v46
    %120 = vmatpush1.msra.mxu0 %v45
    %121 = vmatprep.subr.mxu0 0.0
    %122 = vmatpush2.msra.mxu0 0.0
    %123 = vmatprep.subr.mxu0 0.0
    %124 = vmatpush2.msra.mxu0 0.0
    %125 = vmatprep.subr.mxu0 0.0
    %126 = vmatpush2.msra.mxu0 0.0
    %127 = vmatprep.subr.mxu0 0.0
    %128 = vmatpush2.msra.mxu0 0.0
    %129 = vmatprep.subr.mxu0 0.0
    %130 = vmatpush2.msra.mxu0 0.0
    %131 = vmatprep.subr.mxu0 0.0
    %132 = vmatpush2.msra.mxu0 0.0
    %133 = vmatprep.subr.mxu0 0.0
    %134 = vmatpush2.msra.mxu0 0.0
    %135 = vmatprep.subr.mxu0 0.0
    %136 = vmatpush2.msra.mxu0 0.0
    %137 = vmatprep.subr.mxu0 0.0
    %138 = vmatpush2.msra.mxu0 0.0
    %139 = vmatprep.subr.mxu0 0.0
    %140 = vmatpush2.msra.mxu0 0.0
    %141 = vmatprep.subr.mxu0 0.0
    %142 = vmatpush2.msra.mxu0 0.0
    %143 = vmatprep.subr.mxu0 0.0
    %144 = vmatpush2.msra.mxu0 0.0
    %145 = vmatprep.subr.mxu0 0.0
    %146 = vmatpush2.msra.mxu0 0.0
    %147 = vmatprep.subr.mxu0 0.0
    %148 = vmatpush2.msra.mxu0 0.0
    %149 = vmatprep.subr.mxu0 0.0
    %150 = vmatpush2.msra.mxu0 0.0
    %151 = vmatprep.subr.mxu0 0.0
    %152 = vmatpush2.msra.mxu0 0.0
    %153 = vmatprep.mubr.f32.mxu0 0.0
    %154 = vmatmul.mubr.f32.gmra.mxu0 %v43
    %v155 = vpop.f32.mrf.mxu0
    %v156 = vadd.f32 %v82, %v155
    %v157 = vpop.f32.mrf.mxu0
    %v158 = vadd.f32 %v86, %v157
    %159 = vmatprep.mubr.f32.mxu0 0.0
    %160 = vmatmul.mubr.f32.gmra.mxu0 %v44
    %v161 = vpop.f32.mrf.mxu0
    %v162 = vadd.f32 %v82, %v161
    %v163 = vpop.f32.mrf.mxu0
    %v164 = vadd.f32 %v86, %v163
    %165 = vdwg.mxu0
    %v166 = vmax.f32 %v156, %v158
    %v167 = vmax.f32 %v162, %v164
    %168 = vst [vmem:[#allocation7] sm:$0xff] %v166
    %169 = vst [vmem:[#allocation7 + $0x8] sm:$0xff] %v167
    // Predicated region
    $region22: #{tpu_custom_call.1} parent=1 // pred_check
      _
    $region23: #{tpu_custom_call.1} parent=1 // pred_check_branch
      %171 = sbr.rel (0) target = $region25
    $region24: #{tpu_custom_call.1} parent=1 // pred_region
      %s173 = ssub.s32 256, 256
      %174 = vsyncadd [#allocation4], %s173
      %s175 = sshll.u32 [#allocation7], 4
      %s176 = int_to_ptr.vmem [resolvable:$true] %s175
      %181 = dma.vmem_to_hbm [thread:$0]  %s176, 256, %s3, [#allocation4], 128, 128, 8
    $region25: #{tpu_custom_call.1} parent=1 // pred_fallthru
      _
    // Predicated region
    $region26: #{tpu_custom_call.1} parent=1 // pred_check
      _
    $region27: #{tpu_custom_call.1} parent=1 // pred_check_branch
      %183 = sbr.rel (0) target = $region29
    $region28: #{tpu_custom_call.1} parent=1 // pred_region
      %184 = dma.done [#allocation4], 256
    $region29: #{tpu_custom_call.1} parent=1 // pred_fallthru
      _
    %185 = vsyncpa [#allocation3], 1
    %186 = vsyncpa [#allocation6], 1
    %187 = vsyncpa [#allocation4], 1

</llo_original>
